<compile_context>
chip_gen: v5e
topology: v5e:2x2
jax: 0.10.0
libtpu: 0.0.40
codegen_flags: <defaults>
</compile_context>

<pallas_src>
import functools

import jax
import jax.numpy as jnp
from jax.experimental import pallas as pl
from jax.experimental.pallas import tpu as pltpu


def attention_block_kernel(x_ref, wgtp_ref, bgtp_ref, ww_ref, bw_ref, z_ref):
    """One batch-tile of the AttentionBlock forward.

    x:    (TB, C)       packed g/theta/phi weight: (C, 3D), bias (1, 3D)
    W:    (D, C), bias (1, C)            D = C // 8
    z:    (TB, C) = W(softmax(phi ⊗ theta) @ g) + x
    """
    D = ww_ref.shape[0]

    x = x_ref[...]                                   # input dtype (f32 or bf16)
    x_f32 = x.astype(jnp.float32)                    # residual / elementwise in f32

    # Single fused projection matmul on the MXU, f32 accumulate.
    proj = jnp.dot(x, wgtp_ref[...], preferred_element_type=jnp.float32)
    proj = proj + bgtp_ref[...].astype(jnp.float32)  # (TB, 3D)

    g_x = proj[:, 0 * D:1 * D]                       # (TB, D)
    theta_x = proj[:, 1 * D:2 * D]                   # (TB, D)
    phi_x = proj[:, 2 * D:3 * D]                     # (TB, D)

    # f[b, i, j] = phi_x[b, i] * theta_x[b, j]; exact analytic row-max (no (TB,D,D) XLU reduce).
    tmax = jnp.max(theta_x, axis=-1, keepdims=True)  # (TB, 1)
    tmin = jnp.min(theta_x, axis=-1, keepdims=True)  # (TB, 1)
    rowmax = jnp.where(phi_x >= 0, phi_x * tmax, phi_x * tmin)          # (TB, D)

    # Numerically-stable softmax fused with the weighted sum over g_x.
    e = jnp.exp(phi_x[:, :, None] * theta_x[:, None, :] - rowmax[:, :, None])  # (TB, D, D)
    num = jnp.sum(e * g_x[:, None, :], axis=-1)                         # (TB, D)
    den = jnp.sum(e, axis=-1)                                           # (TB, D)
    y = num * pl.reciprocal(den, approx=True)                           # (TB, D)

    # Output projection + residual.
    w_y = jnp.dot(y.astype(ww_ref.dtype), ww_ref[...],
                  preferred_element_type=jnp.float32)
    w_y = w_y + bw_ref[...].astype(jnp.float32)                         # (TB, C)
    z_ref[...] = (w_y + x_f32).astype(z_ref.dtype)


@functools.partial(jax.jit, static_argnames=("block_b",))
def attention_block(x, w_gtp, b_gtp, ww, bw, *, block_b=256):
    """x: (B, C); w_gtp: (C, 3D); b_gtp: (1, 3D); ww: (D, C); bw: (1, C)."""
    B, C = x.shape
    D = ww.shape[0]

    # Batch tile: multiple of 8 sublanes, capped at block_b (256 matches v6e/v7x MXU rows).
    TB = min(block_b, max(B, 8))
    TB = max(8, (TB // 8) * 8)
    Bp = pl.cdiv(B, TB) * TB
    if Bp != B:
        x = jnp.pad(x, ((0, Bp - B), (0, 0)))
    grid = (Bp // TB,)

    # VMEM per step ~ 2*(TB*C) + TB*3D + TB*D*D (f32) + weights; with TB=256 this is
    # well under the v7x 32 MiB scoped limit for typical C, so no vmem_limit override.
    out = pl.pallas_call(
        attention_block_kernel,
        out_shape=jax.ShapeDtypeStruct((Bp, C), x.dtype),
        grid=grid,
        in_specs=[
            pl.BlockSpec((TB, C), lambda i: (i, 0)),       # x tile (pipelined)
            pl.BlockSpec((C, 3 * D), lambda i: (0, 0)),    # packed g/theta/phi weight
            pl.BlockSpec((1, 3 * D), lambda i: (0, 0)),    # packed bias
            pl.BlockSpec((D, C), lambda i: (0, 0)),        # W weight
            pl.BlockSpec((1, C), lambda i: (0, 0)),        # W bias
        ],
        out_specs=pl.BlockSpec((TB, C), lambda i: (i, 0)),
        compiler_params=pltpu.CompilerParams(
            dimension_semantics=("parallel",)),
    )(x, w_gtp, b_gtp, ww, bw)

    return out[:B] if Bp != B else out


def attention_block_ref(x, wg, bg, wt, bt, wp, bp, ww, bw):
    """Pure-JAX reference mirroring the PyTorch forward exactly (f32)."""
    B, C = x.shape
    D = C // 8
    g_x = (x @ wg + bg).reshape(B, D, 1)
    theta_x = (x @ wt + bt).reshape(B, D, 1).transpose(0, 2, 1)   # (B, 1, D)
    phi_x = (x @ wp + bp).reshape(B, D, 1)                        # (B, D, 1)
    f = jnp.matmul(phi_x, theta_x)                                # (B, D, D)
    f_div_C = jax.nn.softmax(f, axis=-1)
    y = jnp.matmul(f_div_C, g_x).reshape(B, D)
    w_y = y @ ww + bw
    return w_y + x


if __name__ == "__main__":
    C = 64            # in_channels
    D = C // 8

    key = jax.random.PRNGKey(0)
    ks = jax.random.split(key, 9)
    scale = 0.1

    wg = scale * jax.random.normal(ks[1], (C, D), dtype=jnp.float32)
    bg = scale * jax.random.normal(ks[2], (1, D), dtype=jnp.float32)
    wt = scale * jax.random.normal(ks[3], (C, D), dtype=jnp.float32)
    bt = scale * jax.random.normal(ks[4], (1, D), dtype=jnp.float32)
    wp = scale * jax.random.normal(ks[5], (C, D), dtype=jnp.float32)
    bp = scale * jax.random.normal(ks[6], (1, D), dtype=jnp.float32)
    ww = scale * jax.random.normal(ks[7], (D, C), dtype=jnp.float32)
    bw = scale * jax.random.normal(ks[8], (1, C), dtype=jnp.float32)

    # Packed projection params for the fused matmul (g | theta | phi).
    w_gtp = jnp.concatenate([wg, wt, wp], axis=1)   # (C, 3D)
    b_gtp = jnp.concatenate([bg, bt, bp], axis=1)   # (1, 3D)

    # ---- small f32 test (single tile) ----
    B = 8
    x = jax.random.normal(ks[0], (B, C), dtype=jnp.float32)
    z = jax.block_until_ready(attention_block(x, w_gtp, b_gtp, ww, bw))
    z_ref = attention_block_ref(x, wg, bg.reshape(-1), wt, bt.reshape(-1),
                                wp, bp.reshape(-1), ww, bw.reshape(-1))
    assert z.shape == (B, C)
    # approx=True reciprocal -> slightly looser tolerance than exact f32.
    assert jnp.allclose(z, z_ref, atol=1e-2, rtol=1e-2), "f32 mismatch vs reference"

    # ---- gridded / padded f32 test (B not a multiple of the tile) ----
    B2 = 528
    x2 = jax.random.normal(jax.random.PRNGKey(1), (B2, C), dtype=jnp.float32)
    z2 = jax.block_until_ready(attention_block(x2, w_gtp, b_gtp, ww, bw))
    z2_ref = attention_block_ref(x2, wg, bg.reshape(-1), wt, bt.reshape(-1),
                                 wp, bp.reshape(-1), ww, bw.reshape(-1))
    assert z2.shape == (B2, C)
    assert jnp.allclose(z2, z2_ref, atol=1e-2, rtol=1e-2), "gridded f32 mismatch"

    # ---- bf16 I/O test (HBM-bandwidth lever); softmax math stays f32 in-kernel ----
    zb = jax.block_until_ready(attention_block(
        x.astype(jnp.bfloat16), w_gtp.astype(jnp.bfloat16),
        b_gtp.astype(jnp.bfloat16), ww.astype(jnp.bfloat16),
        bw.astype(jnp.bfloat16)))
    assert zb.dtype == jnp.bfloat16 and zb.shape == (B, C)
    assert jnp.allclose(zb.astype(jnp.float32), z_ref, atol=0.15, rtol=0.05), \
        "bf16 mismatch vs reference"

    print("KERNEL_OK")
</pallas_src>

<mosaic_0001>
module attributes {stable_mosaic.version = 11 : i64} {
  func.func @attention_block_kernel(%arg0: i32, %arg1: memref<8x64xf32, #tpu.memory_space<vmem>>, %arg2: memref<64x24xf32, #tpu.memory_space<vmem>>, %arg3: memref<1x24xf32, #tpu.memory_space<vmem>>, %arg4: memref<8x64xf32, #tpu.memory_space<vmem>>, %arg5: memref<1x64xf32, #tpu.memory_space<vmem>>, %arg6: memref<8x64xf32, #tpu.memory_space<vmem>>) attributes {dimension_semantics = [#tpu.dimension_semantics<parallel>], iteration_bounds = array<i64: 1>, scalar_prefetch = 0 : i64, scratch_operands = 0 : i64, tpu.core_type = #tpu.core_type<tc>, window_params = [{transform_indices = @transform_0, window_bounds = array<i64: 8, 64>}, {pipeline_mode = #tpu.pipeline_mode<synchronous>, transform_indices = @transform_1, window_bounds = array<i64: 64, 24>}, {pipeline_mode = #tpu.pipeline_mode<synchronous>, transform_indices = @transform_2, window_bounds = array<i64: 1, 24>}, {pipeline_mode = #tpu.pipeline_mode<synchronous>, transform_indices = @transform_3, window_bounds = array<i64: 8, 64>}, {pipeline_mode = #tpu.pipeline_mode<synchronous>, transform_indices = @transform_4, window_bounds = array<i64: 1, 64>}, {transform_indices = @transform_5, window_bounds = array<i64: 8, 64>}]} {
    %c0 = arith.constant 0 : index
    %c0_0 = arith.constant 0 : index
    %0 = vector.load %arg1[%c0, %c0_0] : memref<8x64xf32, #tpu.memory_space<vmem>>, vector<8x64xf32>
    %c0_1 = arith.constant 0 : index
    %c0_2 = arith.constant 0 : index
    %1 = vector.load %arg2[%c0_1, %c0_2] : memref<64x24xf32, #tpu.memory_space<vmem>>, vector<64x24xf32>
    %cst = arith.constant dense<0.000000e+00> : vector<8x24xf32>
    %2 = tpu.matmul %0, %1, %cst {dimension_numbers = #tpu.dot_dimension_numbers<[1], [0], [0], [1], [0, 0, 1, 1], [], []>} : vector<8x64xf32>, vector<64x24xf32>, vector<8x24xf32> -> vector<8x24xf32>
    %c0_3 = arith.constant 0 : index
    %c0_4 = arith.constant 0 : index
    %3 = vector.load %arg3[%c0_3, %c0_4] : memref<1x24xf32, #tpu.memory_space<vmem>>, vector<1x24xf32>
    %4 = vector.broadcast %3 : vector<1x24xf32> to vector<8x24xf32>
    %5 = arith.addf %2, %4 : vector<8x24xf32>
    %6 = vector.extract_strided_slice %5 {offsets = [0, 0], sizes = [8, 8], strides = [1, 1]} : vector<8x24xf32> to vector<8x8xf32>
    %7 = vector.extract_strided_slice %5 {offsets = [0, 8], sizes = [8, 8], strides = [1, 1]} : vector<8x24xf32> to vector<8x8xf32>
    %8 = vector.extract_strided_slice %5 {offsets = [0, 16], sizes = [8, 8], strides = [1, 1]} : vector<8x24xf32> to vector<8x8xf32>
    %cst_5 = arith.constant dense<0xFF800000> : vector<8xf32>
    %9 = vector.multi_reduction <maximumf>, %7, %cst_5 [1] : vector<8x8xf32> to vector<8xf32>
    %10 = vector.shape_cast %9 : vector<8xf32> to vector<8x1xf32>
    %cst_6 = arith.constant dense<0x7F800000> : vector<8xf32>
    %11 = vector.multi_reduction <minimumf>, %7, %cst_6 [1] : vector<8x8xf32> to vector<8xf32>
    %12 = vector.shape_cast %11 : vector<8xf32> to vector<8x1xf32>
    %cst_7 = arith.constant 0.000000e+00 : f32
    %13 = vector.broadcast %cst_7 : f32 to vector<8x8xf32>
    %14 = arith.cmpf oge, %8, %13 : vector<8x8xf32>
    %15 = vector.broadcast %10 : vector<8x1xf32> to vector<8x8xf32>
    %16 = arith.mulf %8, %15 : vector<8x8xf32>
    %17 = vector.broadcast %12 : vector<8x1xf32> to vector<8x8xf32>
    %18 = arith.mulf %8, %17 : vector<8x8xf32>
    %19 = arith.select %14, %16, %18 : vector<8x8xi1>, vector<8x8xf32>
    %20 = vector.shape_cast %8 : vector<8x8xf32> to vector<8x8x1xf32>
    %21 = vector.shape_cast %7 : vector<8x8xf32> to vector<8x1x8xf32>
    %22 = vector.broadcast %20 : vector<8x8x1xf32> to vector<8x8x8xf32>
    %23 = vector.broadcast %21 : vector<8x1x8xf32> to vector<8x8x8xf32>
    %24 = arith.mulf %22, %23 : vector<8x8x8xf32>
    %25 = vector.shape_cast %19 : vector<8x8xf32> to vector<8x8x1xf32>
    %26 = vector.broadcast %25 : vector<8x8x1xf32> to vector<8x8x8xf32>
    %27 = arith.subf %24, %26 : vector<8x8x8xf32>
    %28 = math.exp %27 : vector<8x8x8xf32>
    %29 = vector.shape_cast %6 : vector<8x8xf32> to vector<8x1x8xf32>
    %30 = vector.broadcast %29 : vector<8x1x8xf32> to vector<8x8x8xf32>
    %31 = arith.mulf %28, %30 : vector<8x8x8xf32>
    %cst_8 = arith.constant dense<0.000000e+00> : vector<8x8xf32>
    %32 = vector.multi_reduction <add>, %31, %cst_8 [2] : vector<8x8x8xf32> to vector<8x8xf32>
    %cst_9 = arith.constant dense<0.000000e+00> : vector<8x8xf32>
    %33 = vector.multi_reduction <add>, %28, %cst_9 [2] : vector<8x8x8xf32> to vector<8x8xf32>
    %34 = tpu.reciprocal %33 {approx = true} : vector<8x8xf32> -> vector<8x8xf32>
    %35 = arith.mulf %32, %34 : vector<8x8xf32>
    %c0_10 = arith.constant 0 : index
    %c0_11 = arith.constant 0 : index
    %36 = vector.load %arg4[%c0_10, %c0_11] : memref<8x64xf32, #tpu.memory_space<vmem>>, vector<8x64xf32>
    %cst_12 = arith.constant dense<0.000000e+00> : vector<8x64xf32>
    %37 = tpu.matmul %35, %36, %cst_12 {dimension_numbers = #tpu.dot_dimension_numbers<[1], [0], [0], [1], [0, 0, 1, 1], [], []>} : vector<8x8xf32>, vector<8x64xf32>, vector<8x64xf32> -> vector<8x64xf32>
    %c0_13 = arith.constant 0 : index
    %c0_14 = arith.constant 0 : index
    %38 = vector.load %arg5[%c0_13, %c0_14] : memref<1x64xf32, #tpu.memory_space<vmem>>, vector<1x64xf32>
    %39 = vector.broadcast %38 : vector<1x64xf32> to vector<8x64xf32>
    %40 = arith.addf %37, %39 : vector<8x64xf32>
    %41 = arith.addf %40, %0 : vector<8x64xf32>
    %c0_15 = arith.constant 0 : index
    %c0_16 = arith.constant 0 : index
    %42 = vector.load %arg6[%c0_15, %c0_16] : memref<8x64xf32, #tpu.memory_space<vmem>>, vector<8x64xf32>
    tpu.vector_store %arg6[%c0_15, %c0_16], %41 {strides = array<i32>} : memref<8x64xf32, #tpu.memory_space<vmem>>, vector<8x64xf32>,
    return
  }
  func.func @transform_0(%arg0: i32) -> (i32, i32) {
    %c0_i32 = arith.constant 0 : i32
    %c0_i32_0 = arith.constant 0 : i32
    return %arg0, %c0_i32 : i32, i32
  }
  func.func @transform_1(%arg0: i32) -> (i32, i32) {
    %c0_i32 = arith.constant 0 : i32
    %c0_i32_0 = arith.constant 0 : i32
    %c0_i32_1 = arith.constant 0 : i32
    return %c0_i32, %c0_i32_0 : i32, i32
  }
  func.func @transform_2(%arg0: i32) -> (i32, i32) {
    %c0_i32 = arith.constant 0 : i32
    %c0_i32_0 = arith.constant 0 : i32
    %c0_i32_1 = arith.constant 0 : i32
    return %c0_i32, %c0_i32_0 : i32, i32
  }
  func.func @transform_3(%arg0: i32) -> (i32, i32) {
    %c0_i32 = arith.constant 0 : i32
    %c0_i32_0 = arith.constant 0 : i32
    %c0_i32_1 = arith.constant 0 : i32
    return %c0_i32, %c0_i32_0 : i32, i32
  }
  func.func @transform_4(%arg0: i32) -> (i32, i32) {
    %c0_i32 = arith.constant 0 : i32
    %c0_i32_0 = arith.constant 0 : i32
    %c0_i32_1 = arith.constant 0 : i32
    return %c0_i32, %c0_i32_0 : i32, i32
  }
  func.func @transform_5(%arg0: i32) -> (i32, i32) {
    %c0_i32 = arith.constant 0 : i32
    %c0_i32_0 = arith.constant 0 : i32
    return %arg0, %c0_i32 : i32, i32
  }
}

</mosaic_0001>

<llo_original>
// kernel: attention_block.1
$region0: #{attention_block.1}
  #allocation0 [shape = 'u32[]', space=smem, size = 0x4, offset = 0x4, fixed_abs, tag = 'smem constant byte address 0x4 - core index']
  #allocation1 [shape = 'u32[72,128]{1,0:T(1,128)}', space=vmem, size = 0x9000, scoped, tag = 'internal scratch']
  %s0 = inlined_call_operand.vmem [shape: f32[8,64], index: 0, kind: input, shape index: {}]
  %s1 = inlined_call_operand.vmem [shape: f32[64,24], index: 1, kind: input, shape index: {}]
  %s2 = inlined_call_operand.vmem [shape: f32[1,24], index: 2, kind: input, shape index: {}]
  %s3 = inlined_call_operand.vmem [shape: f32[8,64], index: 3, kind: input, shape index: {}]
  %s4 = inlined_call_operand.vmem [shape: f32[1,64], index: 4, kind: input, shape index: {}]
  %s5 = inlined_call_operand.hbm [shape: f32[8,64], index: 5, kind: output, shape index: {}]
  %s6 = sld [smem:[#allocation0]]
  $region30: #{attention_block.1} parent=0
    _
  %s8 = ssub.s32 1, %s6
  %s9 = scalar_select 0, %s8, %s6
  $region1: #{attention_block.1} parent=0
    #allocation2 [shape = 'u8[4096]{0}', space=vmem, size = 0x1000, scoped, tag = 'output window, operand 0, single buffered']
    #allocation3 [shape = 's32[1]{0}', space=sflag, size = 0x4, scoped, tag = 'scoped memory for attention_block.1']
    %10 = vsyncpa [#allocation3], 0
    // Predicated region
    $region2: #{attention_block.1} parent=1 // pred_check
      _
    $region3: #{attention_block.1} parent=1 // pred_check_branch
      %12 = sbr.rel (0) target = $region5
    $region4: #{attention_block.1} parent=1 // pred_region
      _
    $region5: #{attention_block.1} parent=1 // pred_fallthru
      _
    // Predicated region
    $region6: #{attention_block.1} parent=1 // pred_check
      _
    $region7: #{attention_block.1} parent=1 // pred_check_branch
      %14 = sbr.rel (0) target = $region9
    $region8: #{attention_block.1} parent=1 // pred_region
      _
    $region9: #{attention_block.1} parent=1 // pred_fallthru
      _
    // Predicated region
    $region10: #{attention_block.1} parent=1 // pred_check
      _
    $region11: #{attention_block.1} parent=1 // pred_check_branch
      %16 = sbr.rel (0) target = $region13
    $region12: #{attention_block.1} parent=1 // pred_region
      _
    $region13: #{attention_block.1} parent=1 // pred_fallthru
      _
    // Predicated region
    $region14: #{attention_block.1} parent=1 // pred_check
      _
    $region15: #{attention_block.1} parent=1 // pred_check_branch
      %18 = sbr.rel (0) target = $region17
    $region16: #{attention_block.1} parent=1 // pred_region
      _
    $region17: #{attention_block.1} parent=1 // pred_fallthru
      _
    // Predicated region
    $region18: #{attention_block.1} parent=1 // pred_check
      _
    $region19: #{attention_block.1} parent=1 // pred_check_branch
      %20 = sbr.rel (0) target = $region21
    $region20: #{attention_block.1} parent=1 // pred_region
      _
    $region21: #{attention_block.1} parent=1 // pred_fallthru
      _
    %v21 = vld [vmem:[%s0] sm:$0xff]
    %v22 = vld [vmem:[%s1] sm:$0xff]
    %v23 = vld [vmem:[%s1 + $0x8] sm:$0xff]
    %v24 = vld [vmem:[%s1 + $0x10] sm:$0xff]
    %v25 = vld [vmem:[%s1 + $0x18] sm:$0xff]
    %v26 = vld [vmem:[%s1 + $0x20] sm:$0xff]
    %v27 = vld [vmem:[%s1 + $0x28] sm:$0xff]
    %v28 = vld [vmem:[%s1 + $0x30] sm:$0xff]
    %v29 = vld [vmem:[%s1 + $0x38] sm:$0xff]
    %v30 = vld [vmem:[%s2] sm:$0x1]
    %v32 = vperm.slane %v30, 0
    %vm34 = vcmask 523264
    %v36 = vsel %vm34, %v21, 0
    %38 = vmatpush.msra.mxu0 0.0
    %39 = vmatpush.msra.mxu0 0.0
    %40 = vmatpush.msra.mxu0 0.0
    %41 = vmatpush.msra.mxu0 0.0
    %42 = vmatpush.msra.mxu0 0.0
    %43 = vmatpush.msra.mxu0 0.0
    %44 = vmatpush.msra.mxu0 0.0
    %45 = vmatpush.msra.mxu0 0.0
    %46 = vmatpush.msra.mxu0 %v29
    %47 = vmatpush.msra.mxu0 %v28
    %48 = vmatpush.msra.mxu0 %v27
    %49 = vmatpush.msra.mxu0 %v26
    %50 = vmatpush.msra.mxu0 %v25
    %51 = vmatpush.msra.mxu0 %v24
    %52 = vmatpush.msra.mxu0 %v23
    %53 = vmatpush.msra.mxu0 %v22
    %54 = vmatmul.f32.gmra.mxu0 %v36
    %v55 = vpop.f32.mrf.mxu0
    %v56 = vadd.f32 %v32, %v55
    %57 = vdwg.mxu0
    %vm58 = vcmask 130112
    %v59 = vsel %vm58, %v56, -inf
    %60 = vmax.xlane.f32.xlu0 %v59
    %v61 = vpop.xlane.xlu0 %60
    %v62 = vsel %vm58, %v56, inf
    %63 = vmin.xlane.f32.xlu0 %v62
    %v64 = vpop.xlane.xlu0 %63
    %vm65 = vcmp.ge.f32.partialorder %v56, 0.0
    %v66 = vmul.f32 %v56, %v61
    %v67 = vmul.f32 %v56, %v64
    %v68 = vsel %vm65, %v66, %v67
    %v69 = vperm.slane %v56, 0
    %v70 = vlaneseq
    %v71 = vshrl.u32 %v70, 7
    %v72 = vadd.s32 %v71, 16
    %73 = vset.pattern.permute.xlu0 %v72
    %74 = vperm.xlu0 %73, %v69
    %v75 = vpop.permute.xlu0 %74
    %v76 = vperm.slane %v56, 1
    %v77 = vlaneseq
    %v78 = vshrl.u32 %v77, 7
    %v79 = vadd.s32 %v78, 16
    %80 = vset.pattern.permute.xlu0 %v79
    %81 = vperm.xlu0 %80, %v76
    %v82 = vpop.permute.xlu0 %81
    %v83 = vperm.slane %v56, 2
    %v84 = vlaneseq
    %v85 = vshrl.u32 %v84, 7
    %v86 = vadd.s32 %v85, 16
    %87 = vset.pattern.permute.xlu0 %v86
    %88 = vperm.xlu0 %87, %v83
    %v89 = vpop.permute.xlu0 %88
    %v90 = vperm.slane %v56, 3
    %v91 = vlaneseq
    %v92 = vshrl.u32 %v91, 7
    %v93 = vadd.s32 %v92, 16
    %94 = vset.pattern.permute.xlu0 %v93
    %95 = vperm.xlu0 %94, %v90
    %v96 = vpop.permute.xlu0 %95
    %v97 = vperm.slane %v56, 4
    %v98 = vlaneseq
    %v99 = vshrl.u32 %v98, 7
    %v100 = vadd.s32 %v99, 16
    %101 = vset.pattern.permute.xlu0 %v100
    %102 = vperm.xlu0 %101, %v97
    %v103 = vpop.permute.xlu0 %102
    %v104 = vperm.slane %v56, 5
    %v105 = vlaneseq
    %v106 = vshrl.u32 %v105, 7
    %v107 = vadd.s32 %v106, 16
    %108 = vset.pattern.permute.xlu0 %v107
    %109 = vperm.xlu0 %108, %v104
    %v110 = vpop.permute.xlu0 %109
    %v111 = vperm.slane %v56, 6
    %v112 = vlaneseq
    %v113 = vshrl.u32 %v112, 7
    %v114 = vadd.s32 %v113, 16
    %115 = vset.pattern.permute.xlu0 %v114
    %116 = vperm.xlu0 %115, %v111
    %v117 = vpop.permute.xlu0 %116
    %v118 = vperm.slane %v56, 7
    %v119 = vlaneseq
    %v120 = vshrl.u32 %v119, 7
    %v121 = vadd.s32 %v120, 16
    %122 = vset.pattern.permute.xlu0 %v121
    %123 = vperm.xlu0 %122, %v118
    %v124 = vpop.permute.xlu0 %123
    %v126 = vrot.slane %v56, 1
    %v127 = vrot.slane %v56, 2
    %v128 = vrot.slane %v56, 3
    %v129 = vrot.slane %v56, 4
    %v130 = vrot.slane %v56, 5
    %v131 = vrot.slane %v56, 6
    %v132 = vrot.slane %v56, 7
    %v133 = vperm.slane %v56, 0
    %v134 = vperm.slane %v126, 0
    %v135 = vperm.slane %v127, 0
    %v136 = vperm.slane %v128, 0
    %v137 = vperm.slane %v129, 0
    %v138 = vperm.slane %v130, 0
    %v139 = vperm.slane %v131, 0
    %v140 = vperm.slane %v132, 0
    %v149 = vmul.f32 %v75, %v133
    %v150 = vmul.f32 %v82, %v134
    %v151 = vmul.f32 %v89, %v135
    %v152 = vmul.f32 %v96, %v136
    %v153 = vmul.f32 %v103, %v137
    %v154 = vmul.f32 %v110, %v138
    %v155 = vmul.f32 %v117, %v139
    %v156 = vmul.f32 %v124, %v140
    %v157 = vperm.slane %v68, 0
    %v158 = vlaneseq
    %v159 = vshrl.u32 %v158, 7
    %v160 = vadd.s32 %v159, 16
    %161 = vset.pattern.permute.xlu0 %v160
    %162 = vperm.xlu0 %161, %v157
    %v163 = vpop.permute.xlu0 %162
    %v164 = vperm.slane %v68, 1
    %v165 = vlaneseq
    %v166 = vshrl.u32 %v165, 7
    %v167 = vadd.s32 %v166, 16
    %168 = vset.pattern.permute.xlu0 %v167
    %169 = vperm.xlu0 %168, %v164
    %v170 = vpop.permute.xlu0 %169
    %v171 = vperm.slane %v68, 2
    %v172 = vlaneseq
    %v173 = vshrl.u32 %v172, 7
    %v174 = vadd.s32 %v173, 16
    %175 = vset.pattern.permute.xlu0 %v174
    %176 = vperm.xlu0 %175, %v171
    %v177 = vpop.permute.xlu0 %176
    %v178 = vperm.slane %v68, 3
    %v179 = vlaneseq
    %v180 = vshrl.u32 %v179, 7
    %v181 = vadd.s32 %v180, 16
    %182 = vset.pattern.permute.xlu0 %v181
    %183 = vperm.xlu0 %182, %v178
    %v184 = vpop.permute.xlu0 %183
    %v185 = vperm.slane %v68, 4
    %v186 = vlaneseq
    %v187 = vshrl.u32 %v186, 7
    %v188 = vadd.s32 %v187, 16
    %189 = vset.pattern.permute.xlu0 %v188
    %190 = vperm.xlu0 %189, %v185
    %v191 = vpop.permute.xlu0 %190
    %v192 = vperm.slane %v68, 5
    %v193 = vlaneseq
    %v194 = vshrl.u32 %v193, 7
    %v195 = vadd.s32 %v194, 16
    %196 = vset.pattern.permute.xlu0 %v195
    %197 = vperm.xlu0 %196, %v192
    %v198 = vpop.permute.xlu0 %197
    %v199 = vperm.slane %v68, 6
    %v200 = vlaneseq
    %v201 = vshrl.u32 %v200, 7
    %v202 = vadd.s32 %v201, 16
    %203 = vset.pattern.permute.xlu0 %v202
    %204 = vperm.xlu0 %203, %v199
    %v205 = vpop.permute.xlu0 %204
    %v206 = vperm.slane %v68, 7
    %v207 = vlaneseq
    %v208 = vshrl.u32 %v207, 7
    %v209 = vadd.s32 %v208, 16
    %210 = vset.pattern.permute.xlu0 %v209
    %211 = vperm.xlu0 %210, %v206
    %v212 = vpop.permute.xlu0 %211
    %v213 = vsub.f32 %v149, %v163
    %v214 = vsub.f32 %v150, %v170
    %v215 = vsub.f32 %v151, %v177
    %v216 = vsub.f32 %v152, %v184
    %v217 = vsub.f32 %v153, %v191
    %v218 = vsub.f32 %v154, %v198
    %v219 = vsub.f32 %v155, %v205
    %v220 = vsub.f32 %v156, %v212
    %v221 = vmul.f32 %v213, 1.442695
    %v222 = vpow.pop %v221
    %v223 = vmul.f32 %v214, 1.442695
    %v224 = vpow.pop %v223
    %v225 = vmul.f32 %v215, 1.442695
    %v226 = vpow.pop %v225
    %v227 = vmul.f32 %v216, 1.442695
    %v228 = vpow.pop %v227
    %v229 = vmul.f32 %v217, 1.442695
    %v230 = vpow.pop %v229
    %v231 = vmul.f32 %v218, 1.442695
    %v232 = vpow.pop %v231
    %v233 = vmul.f32 %v219, 1.442695
    %v234 = vpow.pop %v233
    %v235 = vmul.f32 %v220, 1.442695
    %v236 = vpow.pop %v235
    %237 = vrot.lane.b32.xlu0 %v133, 8
    %v238 = vpop.permute.xlu0 %237
    %239 = vrot.lane.b32.xlu0 %v134, 8
    %v240 = vpop.permute.xlu0 %239
    %241 = vrot.lane.b32.xlu0 %v135, 8
    %v242 = vpop.permute.xlu0 %241
    %243 = vrot.lane.b32.xlu0 %v136, 8
    %v244 = vpop.permute.xlu0 %243
    %245 = vrot.lane.b32.xlu0 %v137, 8
    %v246 = vpop.permute.xlu0 %245
    %247 = vrot.lane.b32.xlu0 %v138, 8
    %v248 = vpop.permute.xlu0 %247
    %249 = vrot.lane.b32.xlu0 %v139, 8
    %v250 = vpop.permute.xlu0 %249
    %251 = vrot.lane.b32.xlu0 %v140, 8
    %v252 = vpop.permute.xlu0 %251
    %v261 = vmul.f32 %v222, %v238
    %v262 = vmul.f32 %v224, %v240
    %v263 = vmul.f32 %v226, %v242
    %v264 = vmul.f32 %v228, %v244
    %v265 = vmul.f32 %v230, %v246
    %v266 = vmul.f32 %v232, %v248
    %v267 = vmul.f32 %v234, %v250
    %v268 = vmul.f32 %v236, %v252
    %277 = vrot.lane.b32.xlu0 %v261, 120
    %v278 = vpop.permute.xlu0 %277
    %279 = vrot.lane.b32.xlu0 %v262, 120
    %v280 = vpop.permute.xlu0 %279
    %281 = vrot.lane.b32.xlu0 %v263, 120
    %v282 = vpop.permute.xlu0 %281
    %283 = vrot.lane.b32.xlu0 %v264, 120
    %v284 = vpop.permute.xlu0 %283
    %285 = vrot.lane.b32.xlu0 %v265, 120
    %v286 = vpop.permute.xlu0 %285
    %287 = vrot.lane.b32.xlu0 %v266, 120
    %v288 = vpop.permute.xlu0 %287
    %289 = vrot.lane.b32.xlu0 %v267, 120
    %v290 = vpop.permute.xlu0 %289
    %291 = vrot.lane.b32.xlu0 %v268, 120
    %v292 = vpop.permute.xlu0 %291
    %vm301 = vcmask 64512
    %v302 = vsel %vm301, %v278, 0.0
    %303 = vadd.xlane.f32.xlu0 %v302
    %v304 = vpop.xlane.xlu0 %303
    %v305 = vsel %vm301, %v280, 0.0
    %306 = vadd.xlane.f32.xlu0 %v305
    %v307 = vpop.xlane.xlu0 %306
    %v308 = vsel %vm301, %v282, 0.0
    %309 = vadd.xlane.f32.xlu0 %v308
    %v310 = vpop.xlane.xlu0 %309
    %v311 = vsel %vm301, %v284, 0.0
    %312 = vadd.xlane.f32.xlu0 %v311
    %v313 = vpop.xlane.xlu0 %312
    %v314 = vsel %vm301, %v286, 0.0
    %315 = vadd.xlane.f32.xlu0 %v314
    %v316 = vpop.xlane.xlu0 %315
    %v317 = vsel %vm301, %v288, 0.0
    %318 = vadd.xlane.f32.xlu0 %v317
    %v319 = vpop.xlane.xlu0 %318
    %v320 = vsel %vm301, %v290, 0.0
    %321 = vadd.xlane.f32.xlu0 %v320
    %v322 = vpop.xlane.xlu0 %321
    %v323 = vsel %vm301, %v292, 0.0
    %324 = vadd.xlane.f32.xlu0 %v323
    %v325 = vpop.xlane.xlu0 %324
    %334 = vrot.lane.b32.xlu0 %v222, 120
    %v335 = vpop.permute.xlu0 %334
    %336 = vrot.lane.b32.xlu0 %v224, 120
    %v337 = vpop.permute.xlu0 %336
    %338 = vrot.lane.b32.xlu0 %v226, 120
    %v339 = vpop.permute.xlu0 %338
    %340 = vrot.lane.b32.xlu0 %v228, 120
    %v341 = vpop.permute.xlu0 %340
    %342 = vrot.lane.b32.xlu0 %v230, 120
    %v343 = vpop.permute.xlu0 %342
    %344 = vrot.lane.b32.xlu0 %v232, 120
    %v345 = vpop.permute.xlu0 %344
    %346 = vrot.lane.b32.xlu0 %v234, 120
    %v347 = vpop.permute.xlu0 %346
    %348 = vrot.lane.b32.xlu0 %v236, 120
    %v349 = vpop.permute.xlu0 %348
    %v358 = vsel %vm301, %v335, 0.0
    %359 = vadd.xlane.f32.xlu0 %v358
    %v360 = vpop.xlane.xlu0 %359
    %v361 = vsel %vm301, %v337, 0.0
    %362 = vadd.xlane.f32.xlu0 %v361
    %v363 = vpop.xlane.xlu0 %362
    %v364 = vsel %vm301, %v339, 0.0
    %365 = vadd.xlane.f32.xlu0 %v364
    %v366 = vpop.xlane.xlu0 %365
    %v367 = vsel %vm301, %v341, 0.0
    %368 = vadd.xlane.f32.xlu0 %v367
    %v369 = vpop.xlane.xlu0 %368
    %v370 = vsel %vm301, %v343, 0.0
    %371 = vadd.xlane.f32.xlu0 %v370
    %v372 = vpop.xlane.xlu0 %371
    %v373 = vsel %vm301, %v345, 0.0
    %374 = vadd.xlane.f32.xlu0 %v373
    %v375 = vpop.xlane.xlu0 %374
    %v376 = vsel %vm301, %v347, 0.0
    %377 = vadd.xlane.f32.xlu0 %v376
    %v378 = vpop.xlane.xlu0 %377
    %v379 = vsel %vm301, %v349, 0.0
    %380 = vadd.xlane.f32.xlu0 %v379
    %v381 = vpop.xlane.xlu0 %380
    %v382 = vrcp.pop %v360
    %v383 = vrcp.pop %v363
    %v384 = vrcp.pop %v366
    %v385 = vrcp.pop %v369
    %v386 = vrcp.pop %v372
    %v387 = vrcp.pop %v375
    %v388 = vrcp.pop %v378
    %v389 = vrcp.pop %v381
    %v390 = vmul.f32 %v304, %v382
    %v391 = vmul.f32 %v307, %v383
    %v392 = vmul.f32 %v310, %v384
    %v393 = vmul.f32 %v313, %v385
    %v394 = vmul.f32 %v316, %v386
    %v395 = vmul.f32 %v319, %v387
    %v396 = vmul.f32 %v322, %v388
    %v397 = vmul.f32 %v325, %v389
    %v398 = vld [vmem:[%s3] sm:$0xff]
    %v399 = vld [vmem:[%s4] sm:$0x1]
    %v401 = vperm.slane %v399, 0
    %v411 = vlaneseq
    %v412 = vand.u32 %v411, 127
    %v413 = vperm.slane %v390, %v412
    %v414 = vperm.slane %v391, %v412
    %v415 = vperm.slane %v392, %v412
    %v416 = vperm.slane %v393, %v412
    %v417 = vperm.slane %v394, %v412
    %v418 = vperm.slane %v395, %v412
    %v419 = vperm.slane %v396, %v412
    %v420 = vperm.slane %v397, %v412
    %vm421 = vcmask 1041409
    %v422 = vsel %vm421, %v414, %v413
    %vm423 = vcmask 1042434
    %v424 = vsel %vm423, %v415, %v422
    %vm425 = vcmask 1043459
    %v426 = vsel %vm425, %v416, %v424
    %vm427 = vcmask 1044484
    %v428 = vsel %vm427, %v417, %v426
    %vm429 = vcmask 1045509
    %v430 = vsel %vm429, %v418, %v428
    %vm431 = vcmask 1046534
    %v432 = vsel %vm431, %v419, %v430
    %vm433 = vcmask 1047559
    %v434 = vsel %vm433, %v420, %v432
    %v435 = vsel %vm301, %v434, 0
    %437 = vmatpush.msra.mxu0 0.0
    %438 = vmatpush.msra.mxu0 0.0
    %439 = vmatpush.msra.mxu0 0.0
    %440 = vmatpush.msra.mxu0 0.0
    %441 = vmatpush.msra.mxu0 0.0
    %442 = vmatpush.msra.mxu0 0.0
    %443 = vmatpush.msra.mxu0 0.0
    %444 = vmatpush.msra.mxu0 0.0
    %445 = vmatpush.msra.mxu0 0.0
    %446 = vmatpush.msra.mxu0 0.0
    %447 = vmatpush.msra.mxu0 0.0
    %448 = vmatpush.msra.mxu0 0.0
    %449 = vmatpush.msra.mxu0 0.0
    %450 = vmatpush.msra.mxu0 0.0
    %451 = vmatpush.msra.mxu0 0.0
    %452 = vmatpush.msra.mxu0 %v398
    %453 = vmatmul.f32.gmra.mxu0 %v435
    %v454 = vpop.f32.mrf.mxu0
    %v455 = vadd.f32 %v401, %v454
    %456 = vdwg.mxu0
    %v457 = vadd.f32 %v455, %v21
    %458 = vst.msk [vmem:[#allocation2] sm:$0xff] %vm34, %v457
    // Predicated region
    $region22: #{attention_block.1} parent=1 // pred_check
      _
    $region23: #{attention_block.1} parent=1 // pred_check_branch
      %460 = sbr.rel (0) target = $region25
    $region24: #{attention_block.1} parent=1 // pred_region
      %462 = vsyncadd [#allocation3], 0
      %s464 = sshll.u32 [#allocation2], 4
      %s465 = int_to_ptr.vmem [resolvable:$true] %s464
      %s466 = sshll.u32 %s5, 4
      %s467 = int_to_ptr.hbm [resolvable:$true] %s466
      %469 = dma.vmem_to_hbm [thread:$0]  %s465, 128, %s467, [#allocation3]
    $region25: #{attention_block.1} parent=1 // pred_fallthru
      _
    // Predicated region
    $region26: #{attention_block.1} parent=1 // pred_check
      _
    $region27: #{attention_block.1} parent=1 // pred_check_branch
      %471 = sbr.rel (0) target = $region29
    $region28: #{attention_block.1} parent=1 // pred_region
      %473 = dma.done [#allocation3], 128
    $region29: #{attention_block.1} parent=1 // pred_fallthru
      _
    %474 = vsyncpa [#allocation3], 1

</llo_original>
